<compile_context>
chip_gen: v7x
topology: tpu7x:2x2x1
jax: 0.10.0
libtpu: 0.0.40
codegen_flags: <defaults>
</compile_context>

<pallas_src>
import math

import jax
import jax.numpy as jnp
from jax.experimental import pallas as pl
from jax.experimental.pallas import tpu as pltpu


def _round_up(v, m):
    return (v + m - 1) // m * m


def _mlp_kernel(x_ref, *refs):
    """Fused MLP: per layer bf16 matmul (f32 MXU accumulation) -> ReLU.

    refs = (w1_ref, ..., wk_ref, o_ref); each w_ref is (C_{i-1}p, C_ip),
    already transposed from torch's (out, in) layout and zero-padded to
    lane multiples.
    """
    w_refs = refs[:-1]
    o_ref = refs[-1]
    n_layers = len(w_refs)

    h = x_ref[...]                                  # bf16 (tm, C0p)
    h32 = None
    for idx, w_ref in enumerate(w_refs):
        # MXU matmul: bf16 x bf16 -> f32 accumulate.
        h32 = jnp.dot(h, w_ref[...], preferred_element_type=jnp.float32)
        h32 = jnp.maximum(h32, 0.0)                 # ReLU after every Linear
        if idx + 1 < n_layers:
            h = h32.astype(jnp.bfloat16)            # back to MXU input dtype
    o_ref[...] = h32.astype(o_ref.dtype)


def mlp1d_forward(x, weights, *, tm=512, vmem_budget_bytes=36 * 1024 * 1024):
    """Apply MLP1dLayer forward (bias=False, norm=None, act='relu').

    x:        (B, N, C_in) float array
    weights:  list of torch-layout weights, weights[i] has shape (C_i, C_{i-1})
    returns:  (B, N, C_out) with x.dtype
    """
    B, N, C_in = x.shape
    M = B * N
    out_dtype = x.dtype
    out_bytes = jnp.dtype(out_dtype).itemsize

    # ---- Wrapper-side layout plumbing (glue, not the hot path) ----------
    chans = [C_in] + [int(w.shape[0]) for w in weights]
    chans_p = [_round_up(c, 128) for c in chans]     # full-lane channel dims
    C_out = chans[-1]

    # Transpose to (in, out), zero-pad channels, cast to bf16 once.
    # TODO(synk): for channels beyond ~1-2K, switch to K/N weight tiling with
    # an f32 VMEM accumulator instead of whole-weight residency.
    w_ts = []
    for li, w in enumerate(weights):
        wt = jnp.asarray(w, jnp.float32).T           # (C_{i-1}, C_i)
        wt = jnp.pad(wt, ((0, chans_p[li] - chans[li]),
                          (0, chans_p[li + 1] - chans[li + 1])))
        w_ts.append(wt.astype(jnp.bfloat16))

    # Row tile: big for step-overhead amortization (>=512 lands near the HBM
    # roofline plateau), but never larger than the (padded) row count, and
    # kept under the VMEM budget.  Multiple of 16 for bf16 sublane packing.
    tm = max(16, min(tm, _round_up(M, 16)))

    def _vmem_bytes(tile_m):
        io = (2 * tile_m * chans_p[0] * 2 +              # bf16 input, 2 bufs
              2 * tile_m * chans_p[-1] * out_bytes)      # output, 2 bufs
        ws = 2 * sum(wt.size * 2 for wt in w_ts)         # bf16 weights, 2 bufs
        # Live intermediates inside the body: one f32 result + one bf16 copy
        # of the widest layer output.
        inter = tile_m * max(chans_p) * (4 + 2)
        return io + ws + inter

    while tm > 16 and _vmem_bytes(tm) > vmem_budget_bytes:
        tm //= 2

    M_pad = _round_up(M, tm)
    x2d = jnp.pad(x.reshape(M, C_in),
                  ((0, M_pad - M), (0, chans_p[0] - C_in))).astype(jnp.bfloat16)

    in_specs = [pl.BlockSpec((tm, chans_p[0]), lambda i: (i, 0))]
    for wt in w_ts:
        # Whole (padded) weight resident; constant index_map means the
        # pipeline does not re-fetch it per grid step.
        in_specs.append(pl.BlockSpec(wt.shape, lambda i: (0, 0)))

    out = pl.pallas_call(
        _mlp_kernel,
        out_shape=jax.ShapeDtypeStruct((M_pad, chans_p[-1]), out_dtype),
        grid_spec=pltpu.PrefetchScalarGridSpec(
            num_scalar_prefetch=0,
            grid=(M_pad // tm,),
            in_specs=in_specs,
            out_specs=pl.BlockSpec((tm, chans_p[-1]), lambda i: (i, 0)),
        ),
        compiler_params=pltpu.CompilerParams(
            dimension_semantics=("parallel",),
            vmem_limit_bytes=48 * 1024 * 1024,
        ),
    )(x2d, *w_ts)

    # Strip row / channel padding (cheap slice in the wrapper).
    return out[:M, :C_out].reshape(B, N, C_out)


def kaiming_normal(key, out_c, in_c):
    # torch.nn.init.kaiming_normal_ default: fan_in mode, leaky_relu a=0
    # => gain = sqrt(2), std = gain / sqrt(fan_in)
    std = math.sqrt(2.0) / math.sqrt(in_c)
    return std * jax.random.normal(key, (out_c, in_c), dtype=jnp.float32)


if __name__ == "__main__":
    # channels = [16, 32, 16] -> Linear(16,32,bias=False), ReLU,
    #                            Linear(32,16,bias=False), ReLU
    channels = [16, 32, 16]
    B, N = 2, 16

    key = jax.random.PRNGKey(0)
    key_x, *w_keys = jax.random.split(key, 1 + (len(channels) - 1))

    x = jax.random.normal(key_x, (B, N, channels[0]), dtype=jnp.float32)
    weights = [
        kaiming_normal(w_keys[i], channels[i + 1], channels[i])
        for i in range(len(channels) - 1)
    ]

    y = mlp1d_forward(x, weights)
    y = jax.block_until_ready(y)
    assert y.shape == (B, N, channels[-1])

    # Reference mimicking the kernel's operand precision (bf16 operands,
    # f32 accumulation), in plain JAX.
    ref = x.astype(jnp.bfloat16).astype(jnp.float32)
    n_layers = len(weights)
    for i, w in enumerate(weights):
        wt = w.astype(jnp.bfloat16).astype(jnp.float32)
        ref = jnp.maximum(ref @ wt.T, 0.0)
        if i + 1 < n_layers:
            ref = ref.astype(jnp.bfloat16).astype(jnp.float32)
    assert jnp.allclose(y, ref, atol=2e-2, rtol=2e-2), (
        "max abs diff vs bf16-mimic ref: %f" % float(jnp.max(jnp.abs(y - ref))))

    # Sanity vs. exact f32 torch-semantics math (loose tol: bf16 operands).
    ref32 = x
    for w in weights:
        ref32 = jnp.maximum(ref32 @ w.T, 0.0)
    assert jnp.allclose(y, ref32, atol=1e-1, rtol=1e-1)

    print("KERNEL_OK")
</pallas_src>

<mosaic_0001>
module attributes {stable_mosaic.version = 11 : i64} {
  func.func @_mlp_kernel(%arg0: i32, %arg1: memref<32x128xbf16, #tpu.memory_space<vmem>>, %arg2: memref<128x128xbf16, #tpu.memory_space<vmem>>, %arg3: memref<128x128xbf16, #tpu.memory_space<vmem>>, %arg4: memref<32x128xf32, #tpu.memory_space<vmem>>) attributes {dimension_semantics = [#tpu.dimension_semantics<parallel>], iteration_bounds = array<i64: 1>, scalar_prefetch = 0 : i64, scratch_operands = 0 : i64, tpu.core_type = #tpu.core_type<tc>, window_params = [{transform_indices = @transform_0, window_bounds = array<i64: 32, 128>}, {pipeline_mode = #tpu.pipeline_mode<synchronous>, transform_indices = @transform_1, window_bounds = array<i64: 128, 128>}, {pipeline_mode = #tpu.pipeline_mode<synchronous>, transform_indices = @transform_2, window_bounds = array<i64: 128, 128>}, {transform_indices = @transform_3, window_bounds = array<i64: 32, 128>}]} {
    %c0 = arith.constant 0 : index
    %c0_0 = arith.constant 0 : index
    %0 = vector.load %arg1[%c0, %c0_0] : memref<32x128xbf16, #tpu.memory_space<vmem>>, vector<32x128xbf16>
    %c0_1 = arith.constant 0 : index
    %c0_2 = arith.constant 0 : index
    %1 = vector.load %arg2[%c0_1, %c0_2] : memref<128x128xbf16, #tpu.memory_space<vmem>>, vector<128x128xbf16>
    %cst = arith.constant dense<0.000000e+00> : vector<32x128xf32>
    %2 = tpu.matmul %0, %1, %cst {dimension_numbers = #tpu.dot_dimension_numbers<[1], [0], [0], [1], [0, 0, 1, 1], [], []>} : vector<32x128xbf16>, vector<128x128xbf16>, vector<32x128xf32> -> vector<32x128xf32>
    %cst_3 = arith.constant 0.000000e+00 : f32
    %3 = vector.broadcast %cst_3 : f32 to vector<32x128xf32>
    %4 = arith.maximumf %2, %3 : vector<32x128xf32>
    %5 = arith.truncf %4 : vector<32x128xf32> to vector<32x128xbf16>
    %c0_4 = arith.constant 0 : index
    %c0_5 = arith.constant 0 : index
    %6 = vector.load %arg3[%c0_4, %c0_5] : memref<128x128xbf16, #tpu.memory_space<vmem>>, vector<128x128xbf16>
    %cst_6 = arith.constant dense<0.000000e+00> : vector<32x128xf32>
    %7 = tpu.matmul %5, %6, %cst_6 {dimension_numbers = #tpu.dot_dimension_numbers<[1], [0], [0], [1], [0, 0, 1, 1], [], []>} : vector<32x128xbf16>, vector<128x128xbf16>, vector<32x128xf32> -> vector<32x128xf32>
    %cst_7 = arith.constant 0.000000e+00 : f32
    %8 = vector.broadcast %cst_7 : f32 to vector<32x128xf32>
    %9 = arith.maximumf %7, %8 : vector<32x128xf32>
    %c0_8 = arith.constant 0 : index
    %c0_9 = arith.constant 0 : index
    %10 = vector.load %arg4[%c0_8, %c0_9] : memref<32x128xf32, #tpu.memory_space<vmem>>, vector<32x128xf32>
    tpu.vector_store %arg4[%c0_8, %c0_9], %9 {strides = array<i32>} : memref<32x128xf32, #tpu.memory_space<vmem>>, vector<32x128xf32>,
    return
  }
  func.func @transform_0(%arg0: i32) -> (i32, i32) {
    %c0_i32 = arith.constant 0 : i32
    %c0_i32_0 = arith.constant 0 : i32
    return %arg0, %c0_i32 : i32, i32
  }
  func.func @transform_1(%arg0: i32) -> (i32, i32) {
    %c0_i32 = arith.constant 0 : i32
    %c0_i32_0 = arith.constant 0 : i32
    %c0_i32_1 = arith.constant 0 : i32
    return %c0_i32, %c0_i32_0 : i32, i32
  }
  func.func @transform_2(%arg0: i32) -> (i32, i32) {
    %c0_i32 = arith.constant 0 : i32
    %c0_i32_0 = arith.constant 0 : i32
    %c0_i32_1 = arith.constant 0 : i32
    return %c0_i32, %c0_i32_0 : i32, i32
  }
  func.func @transform_3(%arg0: i32) -> (i32, i32) {
    %c0_i32 = arith.constant 0 : i32
    %c0_i32_0 = arith.constant 0 : i32
    return %arg0, %c0_i32 : i32, i32
  }
}

</mosaic_0001>

<llo_original>
// kernel: tpu_custom_call.1
$region0: #{tpu_custom_call.1}
  #allocation0 [shape = 'u32[]', space=smem, size = 0x4, offset = 0x4, fixed_abs, tag = 'smem constant byte address 0x4 - core index']
  #allocation1 [shape = 'u32[144,128]{1,0:T(1,128)}', space=vmem, size = 0x12000, scoped, tag = 'internal scratch']
  %s0 = inlined_call_operand.hbm [shape: bf16[32,128], index: 0, kind: input, shape index: {}]
  %s1 = inlined_call_operand.hbm [shape: bf16[128,128], index: 1, kind: input, shape index: {}]
  %s2 = inlined_call_operand.hbm [shape: bf16[128,128], index: 2, kind: input, shape index: {}]
  %s3 = inlined_call_operand.hbm [shape: f32[32,128], index: 3, kind: output, shape index: {}]
  %s4 = sld [smem:[#allocation0]]
  $region34: #{tpu_custom_call.1} parent=0
    _
  %s6 = ssub.s32 1, %s4
  %s7 = scalar_select 0, %s6, %s4
  $region1: #{tpu_custom_call.1} parent=0
    #allocation2 [shape = 'u8[8192]{0}', space=vmem, size = 0x2000, scoped, tag = 'input window, operand 0, single buffered']
    #allocation3 [shape = 's32[1]{0}', space=sflag, size = 0x4, scoped, tag = 'scoped memory for tpu_custom_call.1']
    #allocation4 [shape = 's32[1]{0}', space=sflag, size = 0x4, scoped, tag = 'scoped memory for tpu_custom_call.1']
    #allocation5 [shape = 'u8[32768]{0}', space=vmem, size = 0x8000, scoped, tag = 'input window, operand 1, single buffered']
    #allocation6 [shape = 's32[1]{0}', space=sflag, size = 0x4, scoped, tag = 'scoped memory for tpu_custom_call.1']
    #allocation7 [shape = 'u8[32768]{0}', space=vmem, size = 0x8000, scoped, tag = 'input window, operand 2, single buffered']
    #allocation8 [shape = 'u8[16384]{0}', space=vmem, size = 0x4000, scoped, tag = 'output window, operand 0, single buffered']
    %8 = vsyncpa [#allocation3], 0
    %9 = vsyncpa [#allocation6], 0
    %10 = vsyncpa [#allocation4], 0
    // Predicated region
    $region2: #{tpu_custom_call.1} parent=1 // pred_check
      _
    $region3: #{tpu_custom_call.1} parent=1 // pred_check_branch
      %12 = sbr.rel (0) target = $region5
    $region4: #{tpu_custom_call.1} parent=1 // pred_region
      %s14 = ssub.s32 256, 256
      %15 = vsyncadd [#allocation3], %s14
      %s16 = sshll.u32 [#allocation2], 4
      %s17 = int_to_ptr.vmem [resolvable:$true] %s16
      %22 = dma.hbm_to_vmem [thread:$0]  %s0, 256, %s17, [#allocation3], 64, 64, 4
    $region5: #{tpu_custom_call.1} parent=1 // pred_fallthru
      _
    // Predicated region
    $region6: #{tpu_custom_call.1} parent=1 // pred_check
      _
    $region7: #{tpu_custom_call.1} parent=1 // pred_check_branch
      %24 = sbr.rel (0) target = $region9
    $region8: #{tpu_custom_call.1} parent=1 // pred_region
      %s26 = ssub.s32 1024, 1024
      %27 = vsyncadd [#allocation6], %s26
      %s28 = sshll.u32 [#allocation5], 4
      %s29 = int_to_ptr.vmem [resolvable:$true] %s28
      %34 = dma.hbm_to_vmem [thread:$0]  %s1, 1024, %s29, [#allocation6], 64, 64, 4
    $region9: #{tpu_custom_call.1} parent=1 // pred_fallthru
      _
    // Predicated region
    $region10: #{tpu_custom_call.1} parent=1 // pred_check
      _
    $region11: #{tpu_custom_call.1} parent=1 // pred_check_branch
      %36 = sbr.rel (0) target = $region13
    $region12: #{tpu_custom_call.1} parent=1 // pred_region
      %s38 = ssub.s32 1024, 1024
      %39 = vsyncadd [#allocation6], %s38
      %s40 = sshll.u32 [#allocation7], 4
      %s41 = int_to_ptr.vmem [resolvable:$true] %s40
      %46 = dma.hbm_to_vmem [thread:$0]  %s2, 1024, %s41, [#allocation6], 64, 64, 4
    $region13: #{tpu_custom_call.1} parent=1 // pred_fallthru
      _
    // Predicated region
    $region14: #{tpu_custom_call.1} parent=1 // pred_check
      _
    $region15: #{tpu_custom_call.1} parent=1 // pred_check_branch
      %48 = sbr.rel (0) target = $region17
    $region16: #{tpu_custom_call.1} parent=1 // pred_region
      %49 = dma.done [#allocation3], 256
    $region17: #{tpu_custom_call.1} parent=1 // pred_fallthru
      _
    // Predicated region
    $region18: #{tpu_custom_call.1} parent=1 // pred_check
      _
    $region19: #{tpu_custom_call.1} parent=1 // pred_check_branch
      %51 = sbr.rel (0) target = $region21
    $region20: #{tpu_custom_call.1} parent=1 // pred_region
      %52 = dma.done [#allocation6], 1024
    $region21: #{tpu_custom_call.1} parent=1 // pred_fallthru
      _
    // Predicated region
    $region22: #{tpu_custom_call.1} parent=1 // pred_check
      _
    $region23: #{tpu_custom_call.1} parent=1 // pred_check_branch
      %54 = sbr.rel (0) target = $region25
    $region24: #{tpu_custom_call.1} parent=1 // pred_region
      %55 = dma.done [#allocation6], 1024
    $region25: #{tpu_custom_call.1} parent=1 // pred_fallthru
      _
    %v57 = vld [vmem:[#allocation2] sm:$0xf]
    %v58 = vld [vmem:[#allocation2 + $0x4] sm:$0xf]
    %v59 = vld [vmem:[#allocation2 + $0x8] sm:$0xf]
    %v60 = vld [vmem:[#allocation2 + $0xc] sm:$0xf]
    %v61 = vld [vmem:[#allocation5] sm:$0xf]
    %v62 = vld [vmem:[#allocation5 + $0x4] sm:$0xf]
    %v63 = vld [vmem:[#allocation5 + $0x8] sm:$0xf]
    %v64 = vld [vmem:[#allocation5 + $0xc] sm:$0xf]
    %v65 = vld [vmem:[#allocation5 + $0x10] sm:$0xf]
    %v66 = vld [vmem:[#allocation5 + $0x14] sm:$0xf]
    %v67 = vld [vmem:[#allocation5 + $0x18] sm:$0xf]
    %v68 = vld [vmem:[#allocation5 + $0x1c] sm:$0xf]
    %v69 = vld [vmem:[#allocation5 + $0x20] sm:$0xf]
    %v70 = vld [vmem:[#allocation5 + $0x24] sm:$0xf]
    %v71 = vld [vmem:[#allocation5 + $0x28] sm:$0xf]
    %v72 = vld [vmem:[#allocation5 + $0x2c] sm:$0xf]
    %v73 = vld [vmem:[#allocation5 + $0x30] sm:$0xf]
    %v74 = vld [vmem:[#allocation5 + $0x34] sm:$0xf]
    %v75 = vld [vmem:[#allocation5 + $0x38] sm:$0xf]
    %v76 = vld [vmem:[#allocation5 + $0x3c] sm:$0xf]
    %v81 = vunpack.c.l.b16 %v57
    %v82 = vunpack.c.l.b16 %v58
    %v83 = vunpack.c.l.b16 %v59
    %v84 = vunpack.c.l.b16 %v60
    %v85 = vpack.c.b16 %v82, %v81
    %v86 = vpack.c.b16 %v84, %v83
    %v105 = vunpack.c.l.b16 %v61
    %v106 = vunpack.c.l.b16 %v62
    %v107 = vunpack.c.l.b16 %v63
    %v108 = vunpack.c.l.b16 %v64
    %v109 = vunpack.c.l.b16 %v65
    %v110 = vunpack.c.l.b16 %v66
    %v111 = vunpack.c.l.b16 %v67
    %v112 = vunpack.c.l.b16 %v68
    %v113 = vunpack.c.l.b16 %v69
    %v114 = vunpack.c.l.b16 %v70
    %v115 = vunpack.c.l.b16 %v71
    %v116 = vunpack.c.l.b16 %v72
    %v117 = vunpack.c.l.b16 %v73
    %v118 = vunpack.c.l.b16 %v74
    %v119 = vunpack.c.l.b16 %v75
    %v120 = vunpack.c.l.b16 %v76
    %v121 = vpack.c.b16 %v106, %v105
    %v122 = vpack.c.b16 %v108, %v107
    %v123 = vpack.c.b16 %v110, %v109
    %v124 = vpack.c.b16 %v112, %v111
    %v125 = vpack.c.b16 %v114, %v113
    %v126 = vpack.c.b16 %v116, %v115
    %v127 = vpack.c.b16 %v118, %v117
    %v128 = vpack.c.b16 %v120, %v119
    %137 = vmatprep.subr.bf16.mxu0 0
    %138 = vmatpush1.bf16.msra.mxu0 %v121
    %139 = vmatprep.subr.bf16.mxu0 0
    %140 = vmatpush1.bf16.msra.mxu0 %v122
    %141 = vmatprep.subr.bf16.mxu0 0
    %142 = vmatpush1.bf16.msra.mxu0 %v123
    %143 = vmatprep.subr.bf16.mxu0 0
    %144 = vmatpush1.bf16.msra.mxu0 %v124
    %145 = vmatprep.subr.bf16.mxu0 0
    %146 = vmatpush1.bf16.msra.mxu0 %v125
    %147 = vmatprep.subr.bf16.mxu0 0
    %148 = vmatpush1.bf16.msra.mxu0 %v126
    %149 = vmatprep.subr.bf16.mxu0 0
    %150 = vmatpush1.bf16.msra.mxu0 %v127
    %151 = vmatprep.subr.bf16.mxu0 0
    %152 = vmatpush1.bf16.msra.mxu0 %v128
    %153 = vmatprep.subr.bf16.mxu0 0
    %154 = vmatpush1.bf16.msra.mxu0 0
    %155 = vmatprep.subr.bf16.mxu0 0
    %156 = vmatpush1.bf16.msra.mxu0 0
    %157 = vmatprep.subr.bf16.mxu0 0
    %158 = vmatpush1.bf16.msra.mxu0 0
    %159 = vmatprep.subr.bf16.mxu0 0
    %160 = vmatpush1.bf16.msra.mxu0 0
    %161 = vmatprep.subr.bf16.mxu0 0
    %162 = vmatpush1.bf16.msra.mxu0 0
    %163 = vmatprep.subr.bf16.mxu0 0
    %164 = vmatpush1.bf16.msra.mxu0 0
    %165 = vmatprep.subr.bf16.mxu0 0
    %166 = vmatpush1.bf16.msra.mxu0 0
    %167 = vmatprep.subr.bf16.mxu0 0
    %168 = vmatpush1.bf16.msra.mxu0 0
    %169 = vmatprep.mubr.bf16.mxu0 0
    %170 = vmatmul.mubr.bf16.gmra.mrb[0].mxu0 %v85
    %v171 = vpop.f32.mrb[0].mxu0
    %v172 = vadd.f32 0.0, %v171
    %v173 = vpop.f32.mrb[0].mxu0
    %v174 = vpop.f32.mrb[0].mxu0
    %v175 = vadd.f32 0.0, %v174
    %v176 = vpop.f32.mrb[0].mxu0
    %177 = vmatprep.mubr.bf16.mxu0 0
    %178 = vmatmul.mubr.bf16.gmra.mrb[0].mxu0 %v86
    %v179 = vpop.f32.mrb[0].mxu0
    %v180 = vadd.f32 0.0, %v179
    %v181 = vpop.f32.mrb[0].mxu0
    %v182 = vpop.f32.mrb[0].mxu0
    %v183 = vadd.f32 0.0, %v182
    %v184 = vpop.f32.mrb[0].mxu0
    %185 = vdwg.mxu0
    %v186 = vmax.f32 %v172, 0.0
    %v187 = vmax.f32 %v175, 0.0
    %v188 = vmax.f32 %v180, 0.0
    %v189 = vmax.f32 %v183, 0.0
    %v190 = vpack.c.bf16 %v187, %v186
    %v191 = vpack.c.bf16 %v189, %v188
    %v192 = vld [vmem:[#allocation7] sm:$0xf]
    %v193 = vld [vmem:[#allocation7 + $0x4] sm:$0xf]
    %v194 = vld [vmem:[#allocation7 + $0x8] sm:$0xf]
    %v195 = vld [vmem:[#allocation7 + $0xc] sm:$0xf]
    %v196 = vld [vmem:[#allocation7 + $0x10] sm:$0xf]
    %v197 = vld [vmem:[#allocation7 + $0x14] sm:$0xf]
    %v198 = vld [vmem:[#allocation7 + $0x18] sm:$0xf]
    %v199 = vld [vmem:[#allocation7 + $0x1c] sm:$0xf]
    %v200 = vld [vmem:[#allocation7 + $0x20] sm:$0xf]
    %v201 = vld [vmem:[#allocation7 + $0x24] sm:$0xf]
    %v202 = vld [vmem:[#allocation7 + $0x28] sm:$0xf]
    %v203 = vld [vmem:[#allocation7 + $0x2c] sm:$0xf]
    %v204 = vld [vmem:[#allocation7 + $0x30] sm:$0xf]
    %v205 = vld [vmem:[#allocation7 + $0x34] sm:$0xf]
    %v206 = vld [vmem:[#allocation7 + $0x38] sm:$0xf]
    %v207 = vld [vmem:[#allocation7 + $0x3c] sm:$0xf]
    %v224 = vunpack.c.l.b16 %v192
    %v225 = vunpack.c.l.b16 %v193
    %v226 = vunpack.c.l.b16 %v194
    %v227 = vunpack.c.l.b16 %v195
    %v228 = vunpack.c.l.b16 %v196
    %v229 = vunpack.c.l.b16 %v197
    %v230 = vunpack.c.l.b16 %v198
    %v231 = vunpack.c.l.b16 %v199
    %v232 = vunpack.c.l.b16 %v200
    %v233 = vunpack.c.l.b16 %v201
    %v234 = vunpack.c.l.b16 %v202
    %v235 = vunpack.c.l.b16 %v203
    %v236 = vunpack.c.l.b16 %v204
    %v237 = vunpack.c.l.b16 %v205
    %v238 = vunpack.c.l.b16 %v206
    %v239 = vunpack.c.l.b16 %v207
    %v240 = vpack.c.b16 %v225, %v224
    %v241 = vpack.c.b16 %v227, %v226
    %v242 = vpack.c.b16 %v229, %v228
    %v243 = vpack.c.b16 %v231, %v230
    %v244 = vpack.c.b16 %v233, %v232
    %v245 = vpack.c.b16 %v235, %v234
    %v246 = vpack.c.b16 %v237, %v236
    %v247 = vpack.c.b16 %v239, %v238
    %256 = vmatprep.subr.bf16.mxu0 0
    %257 = vmatpush1.bf16.msra.mxu0 %v240
    %258 = vmatprep.subr.bf16.mxu0 0
    %259 = vmatpush1.bf16.msra.mxu0 %v241
    %260 = vmatprep.subr.bf16.mxu0 0
    %261 = vmatpush1.bf16.msra.mxu0 %v242
    %262 = vmatprep.subr.bf16.mxu0 0
    %263 = vmatpush1.bf16.msra.mxu0 %v243
    %264 = vmatprep.subr.bf16.mxu0 0
    %265 = vmatpush1.bf16.msra.mxu0 %v244
    %266 = vmatprep.subr.bf16.mxu0 0
    %267 = vmatpush1.bf16.msra.mxu0 %v245
    %268 = vmatprep.subr.bf16.mxu0 0
    %269 = vmatpush1.bf16.msra.mxu0 %v246
    %270 = vmatprep.subr.bf16.mxu0 0
    %271 = vmatpush1.bf16.msra.mxu0 %v247
    %272 = vmatprep.subr.bf16.mxu0 0
    %273 = vmatpush1.bf16.msra.mxu0 0
    %274 = vmatprep.subr.bf16.mxu0 0
    %275 = vmatpush1.bf16.msra.mxu0 0
    %276 = vmatprep.subr.bf16.mxu0 0
    %277 = vmatpush1.bf16.msra.mxu0 0
    %278 = vmatprep.subr.bf16.mxu0 0
    %279 = vmatpush1.bf16.msra.mxu0 0
    %280 = vmatprep.subr.bf16.mxu0 0
    %281 = vmatpush1.bf16.msra.mxu0 0
    %282 = vmatprep.subr.bf16.mxu0 0
    %283 = vmatpush1.bf16.msra.mxu0 0
    %284 = vmatprep.subr.bf16.mxu0 0
    %285 = vmatpush1.bf16.msra.mxu0 0
    %286 = vmatprep.subr.bf16.mxu0 0
    %287 = vmatpush1.bf16.msra.mxu0 0
    %288 = vmatprep.mubr.bf16.mxu0 0
    %289 = vmatmul.mubr.bf16.gmra.mrb[0].mxu0 %v190
    %v290 = vpop.f32.mrb[0].mxu0
    %v291 = vadd.f32 0.0, %v290
    %v292 = vpop.f32.mrb[0].mxu0
    %v293 = vpop.f32.mrb[0].mxu0
    %v294 = vadd.f32 0.0, %v293
    %v295 = vpop.f32.mrb[0].mxu0
    %296 = vmatprep.mubr.bf16.mxu0 0
    %297 = vmatmul.mubr.bf16.gmra.mrb[0].mxu0 %v191
    %v298 = vpop.f32.mrb[0].mxu0
    %v299 = vadd.f32 0.0, %v298
    %v300 = vpop.f32.mrb[0].mxu0
    %v301 = vpop.f32.mrb[0].mxu0
    %v302 = vadd.f32 0.0, %v301
    %v303 = vpop.f32.mrb[0].mxu0
    %304 = vdwg.mxu0
    %v305 = vmax.f32 %v291, 0.0
    %v306 = vmax.f32 %v294, 0.0
    %v307 = vmax.f32 %v299, 0.0
    %v308 = vmax.f32 %v302, 0.0
    %309 = vst [vmem:[#allocation8] sm:$0xff] %v305
    %310 = vst [vmem:[#allocation8 + $0x8] sm:$0xff] %v306
    %311 = vst [vmem:[#allocation8 + $0x10] sm:$0xff] %v307
    %312 = vst [vmem:[#allocation8 + $0x18] sm:$0xff] %v308
    // Predicated region
    $region26: #{tpu_custom_call.1} parent=1 // pred_check
      _
    $region27: #{tpu_custom_call.1} parent=1 // pred_check_branch
      %314 = sbr.rel (0) target = $region29
    $region28: #{tpu_custom_call.1} parent=1 // pred_region
      %s316 = ssub.s32 512, 512
      %317 = vsyncadd [#allocation4], %s316
      %s318 = sshll.u32 [#allocation8], 4
      %s319 = int_to_ptr.vmem [resolvable:$true] %s318
      %324 = dma.vmem_to_hbm [thread:$0]  %s319, 512, %s3, [#allocation4], 128, 128, 8
    $region29: #{tpu_custom_call.1} parent=1 // pred_fallthru
      _
    // Predicated region
    $region30: #{tpu_custom_call.1} parent=1 // pred_check
      _
    $region31: #{tpu_custom_call.1} parent=1 // pred_check_branch
      %326 = sbr.rel (0) target = $region33
    $region32: #{tpu_custom_call.1} parent=1 // pred_region
      %327 = dma.done [#allocation4], 512
    $region33: #{tpu_custom_call.1} parent=1 // pred_fallthru
      _
    %328 = vsyncpa [#allocation3], 1
    %329 = vsyncpa [#allocation6], 1
    %330 = vsyncpa [#allocation4], 1

</llo_original>
